<compile_context>
chip_gen: v7x
topology: tpu7x:2x2x1
jax: 0.10.0
libtpu: 0.0.40
codegen_flags: <defaults>
</compile_context>

<pallas_src>
import jax
import jax.numpy as jnp
from jax.experimental import pallas as pl
from jax.experimental.pallas import tpu as pltpu

# ----------------------------- configuration -------------------------------
B = 64            # demo batch size (wrapper handles arbitrary B)
D = 8             # general_cfg.data.shape  (number of discrete dims)
S = 4             # general_cfg.data.S      (cardinality of each dim)
HIDDEN_DIMS = (32, 32)            # model_cfg.hidden_dims
NUM_CLASSES = 3                   # num_classes == y_enc_dim
OUTPUT_LAYER_DIM = NUM_CLASSES    # output_layer_dim
STACK_TIME = True                 # model_cfg.stack_time
TIME_ENC_DIM = 1                  # time_encoder.dim (identity encoder here)
INPUT_DIM = D * S + (TIME_ENC_DIM if STACK_TIME else 0)   # 33 (logical)

# lane-friendly padded sizes (explicit padding -> no masked load/store paths)
IN_PAD = 128      # padded input-feature lane dim  (>= INPUT_DIM)
OUT_PAD = 128     # padded output lane dim         (>= OUTPUT_LAYER_DIM)
TB_MAX = 512      # max batch-tile rows (multiple of 8 sublanes)
NEG_BIG = -1e30   # effectively -inf for padded softmax lanes


# ------------------------------ Pallas kernel ------------------------------
def _guide_kernel(x_ref, t_ref, w1_ref, b1_ref, w2_ref, b2_ref, wl_ref, bl_ref,
                  out_ref):
    x = x_ref[...]                                   # (tb, D) int32 states
    tb = x.shape[0]
    cols = jax.lax.broadcasted_iota(jnp.int32, (tb, IN_PAD), 1)

    # Fused one-hot encoding: feature column d*S + x[b, d] is 1.0 for each d
    # (targets never collide across d).  compare+select chain instead of
    # compare+convert+add keeps the VALU slot light at large tiles.
    # NOTE: out-of-range states (x<0 or x>=S) silently yield an all-zero
    # feature group instead of erroring like torch.nn.functional.one_hot.
    h = jnp.zeros((tb, IN_PAD), jnp.float32)
    for d in range(D):
        h = jnp.where(cols == x[:, d:d + 1] + d * S, 1.0, h)

    # Fused (identity) time feature at column D*S; remaining pad lanes stay 0.
    if STACK_TIME:
        h = jnp.where(cols == D * S, t_ref[...], h)

    # Hidden layers: Linear + ReLU (dropout is identity in eval mode).
    # bf16 operands -> single-pass MXU; f32 accumulation / bias / elementwise.
    h = jnp.dot(h.astype(jnp.bfloat16), w1_ref[...],
                preferred_element_type=jnp.float32) + b1_ref[...]
    h = jnp.maximum(h, 0.0)
    h = jnp.dot(h.astype(jnp.bfloat16), w2_ref[...],
                preferred_element_type=jnp.float32) + b2_ref[...]
    h = jnp.maximum(h, 0.0)

    # Output layer, padded to OUT_PAD lanes (pad columns of wl are 0, pad
    # biases are -1e30 -> exp underflows to exactly 0 -> zero pad probability).
    logits = jnp.dot(h.astype(jnp.bfloat16), wl_ref[...],
                     preferred_element_type=jnp.float32) + bl_ref[...]

    # class-distribution mapping: exact softmax (rows sum to 1 to f32 prec).
    m = jnp.max(logits, axis=-1, keepdims=True)
    e = jnp.exp(logits - m)
    denom = jnp.sum(e, axis=-1, keepdims=True)
    out_ref[...] = e * (1.0 / denom)


# ------------------------------ wrapper helpers -----------------------------
def _resident_spec(shape):
    # Full-array block; constant index_map -> weights stay VMEM-resident across
    # batch tiles (Pallas skips the re-DMA when the block index is unchanged).
    zeros = (0,) * len(shape)
    return pl.BlockSpec(shape, lambda i, _z=zeros: _z)


def _choose_batch_tile(b):
    """Batch tile: multiple of 8 sublanes, <= TB_MAX rows, >=2 grid steps when
    the batch allows (keeps both v7x TensorCores busy; harmless on v5e/v6e)."""
    b8 = -(-b // 8) * 8                        # sublane-align the batch
    n_tiles = max(1, -(-b8 // TB_MAX))         # enough tiles to cap tile size
    if b8 >= 16:
        n_tiles = max(n_tiles, 2)              # megacore: >=2 parallel steps
    tb = -(-b8 // (8 * n_tiles)) * 8           # even split, multiple of 8
    b_pad = n_tiles * tb
    return tb, b_pad, n_tiles


def guide_forward_pallas(x, t, params):
    """x: (B, D) int32 discrete states, t: (B,) f32 times -> (B, NUM_CLASSES)."""
    w1, b1, w2, b2, wl, bl = params
    Bn = x.shape[0]
    tb, b_pad, n_tiles = _choose_batch_tile(Bn)

    xp = x.astype(jnp.int32)
    tp = t.reshape(-1, 1).astype(jnp.float32)
    if b_pad != Bn:
        xp = jnp.pad(xp, ((0, b_pad - Bn), (0, 0)))   # pad rows use state 0
        tp = jnp.pad(tp, ((0, b_pad - Bn), (0, 0)))

    out = pl.pallas_call(
        _guide_kernel,
        out_shape=jax.ShapeDtypeStruct((b_pad, OUT_PAD), jnp.float32),
        grid_spec=pltpu.PrefetchScalarGridSpec(
            num_scalar_prefetch=0,
            grid=(n_tiles,),
            in_specs=[
                pl.BlockSpec((tb, D), lambda i: (i, 0)),       # x tile
                pl.BlockSpec((tb, 1), lambda i: (i, 0)),       # t tile
                _resident_spec(w1.shape), _resident_spec(b1.shape),
                _resident_spec(w2.shape), _resident_spec(b2.shape),
                _resident_spec(wl.shape), _resident_spec(bl.shape),
            ],
            out_specs=pl.BlockSpec((tb, OUT_PAD), lambda i: (i, 0)),
        ),
        compiler_params=pltpu.CompilerParams(
            dimension_semantics=("parallel",)),     # batch tiles are independent
    )(xp, tp, w1, b1, w2, b2, wl, bl)

    # Slice off padded rows / lanes (pad-lane probabilities are exactly zero).
    # TODO(synk): for very large production batches, emit bf16 probabilities or
    # fuse this slice into the consumer to cut the 128-lane f32 HBM writeback.
    return out[:Bn, :OUTPUT_LAYER_DIM]


# ------------------------------- JAX "module" ------------------------------
def init_params(key):
    """Deterministic synthetic parameter init (PyTorch Linear shapes, stored
    transposed as (in, out), lane-padded, weights in bf16 for the MXU)."""
    ks = jax.random.split(key, 6)
    scale = 0.1
    w1 = jnp.zeros((IN_PAD, HIDDEN_DIMS[0]), jnp.float32).at[:INPUT_DIM, :].set(
        scale * jax.random.normal(ks[0], (INPUT_DIM, HIDDEN_DIMS[0]), jnp.float32)
    ).astype(jnp.bfloat16)
    b1 = scale * jax.random.normal(ks[1], (1, HIDDEN_DIMS[0]), jnp.float32)
    w2 = (scale * jax.random.normal(
        ks[2], (HIDDEN_DIMS[0], HIDDEN_DIMS[1]), jnp.float32)).astype(jnp.bfloat16)
    b2 = scale * jax.random.normal(ks[3], (1, HIDDEN_DIMS[1]), jnp.float32)
    wl = jnp.zeros((HIDDEN_DIMS[1], OUT_PAD), jnp.float32).at[:, :OUTPUT_LAYER_DIM].set(
        scale * jax.random.normal(ks[4], (HIDDEN_DIMS[1], OUTPUT_LAYER_DIM), jnp.float32)
    ).astype(jnp.bfloat16)
    bl = jnp.full((1, OUT_PAD), NEG_BIG, jnp.float32).at[:, :OUTPUT_LAYER_DIM].set(
        scale * jax.random.normal(ks[5], (1, OUTPUT_LAYER_DIM), jnp.float32))
    return (w1, b1, w2, b2, wl, bl)


def forward(params, batch_data_t, t, is_x_onehot=False):
    xt = batch_data_t['x']
    if is_x_onehot:
        # TODO(synk): soft (relaxed) one-hot inputs are not supported by the
        # fused one-hot kernel; argmax recovers indices exactly only for hard
        # one-hot inputs.
        xt = jnp.argmax(xt, axis=-1)
    return guide_forward_pallas(xt.astype(jnp.int32), t, params)


# ----------------------------------- main -----------------------------------
if __name__ == "__main__":
    key = jax.random.PRNGKey(0)
    k_param, k_x, k_t = jax.random.split(key, 3)

    params = init_params(k_param)

    # discrete states x: (B, D) with values in [0, S)
    x = jax.random.randint(k_x, (B, D), 0, S, dtype=jnp.int32)
    # batched time: (B,)
    t = jax.random.uniform(k_t, (B,), dtype=jnp.float32)

    p_y = forward(params, {'x': x}, t)
    p_y = jax.block_until_ready(p_y)

    # Pure-JAX reference of the same (unpadded) math: bf16 MXU operands,
    # f32 bias / ReLU / softmax — mirrors the kernel exactly.
    w1, b1, w2, b2, wl, bl = params
    h_ref = jnp.concatenate(
        [jax.nn.one_hot(x, S, dtype=jnp.float32).reshape(-1, D * S),
         t.reshape(-1, 1)], axis=-1)
    r = jnp.maximum(jnp.dot(h_ref.astype(jnp.bfloat16), w1[:INPUT_DIM, :],
                            preferred_element_type=jnp.float32) + b1, 0.0)
    r = jnp.maximum(jnp.dot(r.astype(jnp.bfloat16), w2,
                            preferred_element_type=jnp.float32) + b2, 0.0)
    logits = jnp.dot(r.astype(jnp.bfloat16), wl[:, :OUTPUT_LAYER_DIM],
                     preferred_element_type=jnp.float32) + bl[:, :OUTPUT_LAYER_DIM]
    ref = jax.nn.softmax(logits, axis=-1)

    assert p_y.shape == (B, OUTPUT_LAYER_DIM)
    assert jnp.allclose(p_y, ref, atol=1e-4, rtol=1e-4), \
        float(jnp.max(jnp.abs(p_y - ref)))
    assert jnp.allclose(jnp.sum(p_y, axis=-1), 1.0, atol=1e-5)

    print("KERNEL_OK")
</pallas_src>

<mosaic_0001>
module attributes {stable_mosaic.version = 11 : i64} {
  func.func @_guide_kernel(%arg0: i32, %arg1: memref<32x8xi32, #tpu.memory_space<vmem>>, %arg2: memref<32x1xf32, #tpu.memory_space<vmem>>, %arg3: memref<128x32xbf16, #tpu.memory_space<vmem>>, %arg4: memref<1x32xf32, #tpu.memory_space<vmem>>, %arg5: memref<32x32xbf16, #tpu.memory_space<vmem>>, %arg6: memref<1x32xf32, #tpu.memory_space<vmem>>, %arg7: memref<32x128xbf16, #tpu.memory_space<vmem>>, %arg8: memref<1x128xf32, #tpu.memory_space<vmem>>, %arg9: memref<32x128xf32, #tpu.memory_space<vmem>>) attributes {dimension_semantics = [#tpu.dimension_semantics<parallel>], iteration_bounds = array<i64: 2>, scalar_prefetch = 0 : i64, scratch_operands = 0 : i64, tpu.core_type = #tpu.core_type<tc>, window_params = [{transform_indices = @transform_0, window_bounds = array<i64: 32, 8>}, {transform_indices = @transform_1, window_bounds = array<i64: 32, 1>}, {pipeline_mode = #tpu.pipeline_mode<synchronous>, transform_indices = @transform_2, window_bounds = array<i64: 128, 32>}, {pipeline_mode = #tpu.pipeline_mode<synchronous>, transform_indices = @transform_3, window_bounds = array<i64: 1, 32>}, {pipeline_mode = #tpu.pipeline_mode<synchronous>, transform_indices = @transform_4, window_bounds = array<i64: 32, 32>}, {pipeline_mode = #tpu.pipeline_mode<synchronous>, transform_indices = @transform_5, window_bounds = array<i64: 1, 32>}, {pipeline_mode = #tpu.pipeline_mode<synchronous>, transform_indices = @transform_6, window_bounds = array<i64: 32, 128>}, {pipeline_mode = #tpu.pipeline_mode<synchronous>, transform_indices = @transform_7, window_bounds = array<i64: 1, 128>}, {transform_indices = @transform_8, window_bounds = array<i64: 32, 128>}]} {
    %c0 = arith.constant 0 : index
    %c0_0 = arith.constant 0 : index
    %0 = vector.load %arg1[%c0, %c0_0] : memref<32x8xi32, #tpu.memory_space<vmem>>, vector<32x8xi32>
    %1 = tpu.iota {dimensions = array<i32: 1>} : vector<32x128xi32>
    %cst = arith.constant 0.000000e+00 : f32
    %2 = vector.broadcast %cst : f32 to vector<32x128xf32>
    %3 = vector.extract_strided_slice %0 {offsets = [0, 0], sizes = [32, 1], strides = [1, 1]} : vector<32x8xi32> to vector<32x1xi32>
    %c0_i32 = arith.constant 0 : i32
    %4 = vector.broadcast %c0_i32 : i32 to vector<32x1xi32>
    %5 = arith.addi %3, %4 : vector<32x1xi32>
    %6 = vector.broadcast %5 : vector<32x1xi32> to vector<32x128xi32>
    %7 = arith.cmpi eq, %1, %6 : vector<32x128xi32>
    %cst_1 = arith.constant 1.000000e+00 : f32
    %8 = vector.broadcast %cst_1 : f32 to vector<32x128xf32>
    %9 = arith.select %7, %8, %2 : vector<32x128xi1>, vector<32x128xf32>
    %10 = vector.extract_strided_slice %0 {offsets = [0, 1], sizes = [32, 1], strides = [1, 1]} : vector<32x8xi32> to vector<32x1xi32>
    %c4_i32 = arith.constant 4 : i32
    %11 = vector.broadcast %c4_i32 : i32 to vector<32x1xi32>
    %12 = arith.addi %10, %11 : vector<32x1xi32>
    %13 = vector.broadcast %12 : vector<32x1xi32> to vector<32x128xi32>
    %14 = arith.cmpi eq, %1, %13 : vector<32x128xi32>
    %cst_2 = arith.constant 1.000000e+00 : f32
    %15 = vector.broadcast %cst_2 : f32 to vector<32x128xf32>
    %16 = arith.select %14, %15, %9 : vector<32x128xi1>, vector<32x128xf32>
    %17 = vector.extract_strided_slice %0 {offsets = [0, 2], sizes = [32, 1], strides = [1, 1]} : vector<32x8xi32> to vector<32x1xi32>
    %c8_i32 = arith.constant 8 : i32
    %18 = vector.broadcast %c8_i32 : i32 to vector<32x1xi32>
    %19 = arith.addi %17, %18 : vector<32x1xi32>
    %20 = vector.broadcast %19 : vector<32x1xi32> to vector<32x128xi32>
    %21 = arith.cmpi eq, %1, %20 : vector<32x128xi32>
    %cst_3 = arith.constant 1.000000e+00 : f32
    %22 = vector.broadcast %cst_3 : f32 to vector<32x128xf32>
    %23 = arith.select %21, %22, %16 : vector<32x128xi1>, vector<32x128xf32>
    %24 = vector.extract_strided_slice %0 {offsets = [0, 3], sizes = [32, 1], strides = [1, 1]} : vector<32x8xi32> to vector<32x1xi32>
    %c12_i32 = arith.constant 12 : i32
    %25 = vector.broadcast %c12_i32 : i32 to vector<32x1xi32>
    %26 = arith.addi %24, %25 : vector<32x1xi32>
    %27 = vector.broadcast %26 : vector<32x1xi32> to vector<32x128xi32>
    %28 = arith.cmpi eq, %1, %27 : vector<32x128xi32>
    %cst_4 = arith.constant 1.000000e+00 : f32
    %29 = vector.broadcast %cst_4 : f32 to vector<32x128xf32>
    %30 = arith.select %28, %29, %23 : vector<32x128xi1>, vector<32x128xf32>
    %31 = vector.extract_strided_slice %0 {offsets = [0, 4], sizes = [32, 1], strides = [1, 1]} : vector<32x8xi32> to vector<32x1xi32>
    %c16_i32 = arith.constant 16 : i32
    %32 = vector.broadcast %c16_i32 : i32 to vector<32x1xi32>
    %33 = arith.addi %31, %32 : vector<32x1xi32>
    %34 = vector.broadcast %33 : vector<32x1xi32> to vector<32x128xi32>
    %35 = arith.cmpi eq, %1, %34 : vector<32x128xi32>
    %cst_5 = arith.constant 1.000000e+00 : f32
    %36 = vector.broadcast %cst_5 : f32 to vector<32x128xf32>
    %37 = arith.select %35, %36, %30 : vector<32x128xi1>, vector<32x128xf32>
    %38 = vector.extract_strided_slice %0 {offsets = [0, 5], sizes = [32, 1], strides = [1, 1]} : vector<32x8xi32> to vector<32x1xi32>
    %c20_i32 = arith.constant 20 : i32
    %39 = vector.broadcast %c20_i32 : i32 to vector<32x1xi32>
    %40 = arith.addi %38, %39 : vector<32x1xi32>
    %41 = vector.broadcast %40 : vector<32x1xi32> to vector<32x128xi32>
    %42 = arith.cmpi eq, %1, %41 : vector<32x128xi32>
    %cst_6 = arith.constant 1.000000e+00 : f32
    %43 = vector.broadcast %cst_6 : f32 to vector<32x128xf32>
    %44 = arith.select %42, %43, %37 : vector<32x128xi1>, vector<32x128xf32>
    %45 = vector.extract_strided_slice %0 {offsets = [0, 6], sizes = [32, 1], strides = [1, 1]} : vector<32x8xi32> to vector<32x1xi32>
    %c24_i32 = arith.constant 24 : i32
    %46 = vector.broadcast %c24_i32 : i32 to vector<32x1xi32>
    %47 = arith.addi %45, %46 : vector<32x1xi32>
    %48 = vector.broadcast %47 : vector<32x1xi32> to vector<32x128xi32>
    %49 = arith.cmpi eq, %1, %48 : vector<32x128xi32>
    %cst_7 = arith.constant 1.000000e+00 : f32
    %50 = vector.broadcast %cst_7 : f32 to vector<32x128xf32>
    %51 = arith.select %49, %50, %44 : vector<32x128xi1>, vector<32x128xf32>
    %52 = vector.extract_strided_slice %0 {offsets = [0, 7], sizes = [32, 1], strides = [1, 1]} : vector<32x8xi32> to vector<32x1xi32>
    %c28_i32 = arith.constant 28 : i32
    %53 = vector.broadcast %c28_i32 : i32 to vector<32x1xi32>
    %54 = arith.addi %52, %53 : vector<32x1xi32>
    %55 = vector.broadcast %54 : vector<32x1xi32> to vector<32x128xi32>
    %56 = arith.cmpi eq, %1, %55 : vector<32x128xi32>
    %cst_8 = arith.constant 1.000000e+00 : f32
    %57 = vector.broadcast %cst_8 : f32 to vector<32x128xf32>
    %58 = arith.select %56, %57, %51 : vector<32x128xi1>, vector<32x128xf32>
    %c32_i32 = arith.constant 32 : i32
    %59 = vector.broadcast %c32_i32 : i32 to vector<32x128xi32>
    %60 = arith.cmpi eq, %1, %59 : vector<32x128xi32>
    %c0_9 = arith.constant 0 : index
    %c0_10 = arith.constant 0 : index
    %61 = vector.load %arg2[%c0_9, %c0_10] : memref<32x1xf32, #tpu.memory_space<vmem>>, vector<32x1xf32>
    %62 = vector.shape_cast %61 : vector<32x1xf32> to vector<32x1xf32>
    %63 = vector.broadcast %62 : vector<32x1xf32> to vector<32x128xf32>
    %64 = arith.select %60, %63, %58 : vector<32x128xi1>, vector<32x128xf32>
    %65 = arith.truncf %64 : vector<32x128xf32> to vector<32x128xbf16>
    %c0_11 = arith.constant 0 : index
    %c0_12 = arith.constant 0 : index
    %66 = vector.load %arg3[%c0_11, %c0_12] : memref<128x32xbf16, #tpu.memory_space<vmem>>, vector<128x32xbf16>
    %cst_13 = arith.constant dense<0.000000e+00> : vector<32x32xf32>
    %67 = tpu.matmul %65, %66, %cst_13 {dimension_numbers = #tpu.dot_dimension_numbers<[1], [0], [0], [1], [0, 0, 1, 1], [], []>} : vector<32x128xbf16>, vector<128x32xbf16>, vector<32x32xf32> -> vector<32x32xf32>
    %c0_14 = arith.constant 0 : index
    %c0_15 = arith.constant 0 : index
    %68 = vector.load %arg4[%c0_14, %c0_15] : memref<1x32xf32, #tpu.memory_space<vmem>>, vector<1x32xf32>
    %69 = vector.broadcast %68 : vector<1x32xf32> to vector<32x32xf32>
    %70 = arith.addf %67, %69 : vector<32x32xf32>
    %cst_16 = arith.constant 0.000000e+00 : f32
    %71 = vector.broadcast %cst_16 : f32 to vector<32x32xf32>
    %72 = arith.maximumf %70, %71 : vector<32x32xf32>
    %73 = arith.truncf %72 : vector<32x32xf32> to vector<32x32xbf16>
    %c0_17 = arith.constant 0 : index
    %c0_18 = arith.constant 0 : index
    %74 = vector.load %arg5[%c0_17, %c0_18] : memref<32x32xbf16, #tpu.memory_space<vmem>>, vector<32x32xbf16>
    %cst_19 = arith.constant dense<0.000000e+00> : vector<32x32xf32>
    %75 = tpu.matmul %73, %74, %cst_19 {dimension_numbers = #tpu.dot_dimension_numbers<[1], [0], [0], [1], [0, 0, 1, 1], [], []>} : vector<32x32xbf16>, vector<32x32xbf16>, vector<32x32xf32> -> vector<32x32xf32>
    %c0_20 = arith.constant 0 : index
    %c0_21 = arith.constant 0 : index
    %76 = vector.load %arg6[%c0_20, %c0_21] : memref<1x32xf32, #tpu.memory_space<vmem>>, vector<1x32xf32>
    %77 = vector.broadcast %76 : vector<1x32xf32> to vector<32x32xf32>
    %78 = arith.addf %75, %77 : vector<32x32xf32>
    %cst_22 = arith.constant 0.000000e+00 : f32
    %79 = vector.broadcast %cst_22 : f32 to vector<32x32xf32>
    %80 = arith.maximumf %78, %79 : vector<32x32xf32>
    %81 = arith.truncf %80 : vector<32x32xf32> to vector<32x32xbf16>
    %c0_23 = arith.constant 0 : index
    %c0_24 = arith.constant 0 : index
    %82 = vector.load %arg7[%c0_23, %c0_24] : memref<32x128xbf16, #tpu.memory_space<vmem>>, vector<32x128xbf16>
    %cst_25 = arith.constant dense<0.000000e+00> : vector<32x128xf32>
    %83 = tpu.matmul %81, %82, %cst_25 {dimension_numbers = #tpu.dot_dimension_numbers<[1], [0], [0], [1], [0, 0, 1, 1], [], []>} : vector<32x32xbf16>, vector<32x128xbf16>, vector<32x128xf32> -> vector<32x128xf32>
    %c0_26 = arith.constant 0 : index
    %c0_27 = arith.constant 0 : index
    %84 = vector.load %arg8[%c0_26, %c0_27] : memref<1x128xf32, #tpu.memory_space<vmem>>, vector<1x128xf32>
    %85 = vector.broadcast %84 : vector<1x128xf32> to vector<32x128xf32>
    %86 = arith.addf %83, %85 : vector<32x128xf32>
    %cst_28 = arith.constant dense<0xFF800000> : vector<32xf32>
    %87 = vector.multi_reduction <maximumf>, %86, %cst_28 [1] : vector<32x128xf32> to vector<32xf32>
    %88 = vector.shape_cast %87 : vector<32xf32> to vector<32x1xf32>
    %89 = vector.broadcast %88 : vector<32x1xf32> to vector<32x128xf32>
    %90 = arith.subf %86, %89 : vector<32x128xf32>
    %91 = math.exp %90 : vector<32x128xf32>
    %cst_29 = arith.constant dense<0.000000e+00> : vector<32xf32>
    %92 = vector.multi_reduction <add>, %91, %cst_29 [1] : vector<32x128xf32> to vector<32xf32>
    %93 = vector.shape_cast %92 : vector<32xf32> to vector<32x1xf32>
    %cst_30 = arith.constant 1.000000e+00 : f32
    %94 = vector.broadcast %cst_30 : f32 to vector<32x1xf32>
    %95 = arith.divf %94, %93 : vector<32x1xf32>
    %96 = vector.broadcast %95 : vector<32x1xf32> to vector<32x128xf32>
    %97 = arith.mulf %91, %96 : vector<32x128xf32>
    %c0_31 = arith.constant 0 : index
    %c0_32 = arith.constant 0 : index
    %98 = vector.load %arg9[%c0_31, %c0_32] : memref<32x128xf32, #tpu.memory_space<vmem>>, vector<32x128xf32>
    tpu.vector_store %arg9[%c0_31, %c0_32], %97 {strides = array<i32>} : memref<32x128xf32, #tpu.memory_space<vmem>>, vector<32x128xf32>,
    return
  }
  func.func @transform_0(%arg0: i32) -> (i32, i32) {
    %c0_i32 = arith.constant 0 : i32
    %c0_i32_0 = arith.constant 0 : i32
    return %arg0, %c0_i32 : i32, i32
  }
  func.func @transform_1(%arg0: i32) -> (i32, i32) {
    %c0_i32 = arith.constant 0 : i32
    %c0_i32_0 = arith.constant 0 : i32
    return %arg0, %c0_i32 : i32, i32
  }
  func.func @transform_2(%arg0: i32) -> (i32, i32) {
    %c0_i32 = arith.constant 0 : i32
    %c0_i32_0 = arith.constant 0 : i32
    %c0_i32_1 = arith.constant 0 : i32
    return %c0_i32, %c0_i32_0 : i32, i32
  }
  func.func @transform_3(%arg0: i32) -> (i32, i32) {
    %c0_i32 = arith.constant 0 : i32
    %c0_i32_0 = arith.constant 0 : i32
    %c0_i32_1 = arith.constant 0 : i32
    return %c0_i32, %c0_i32_0 : i32, i32
  }
  func.func @transform_4(%arg0: i32) -> (i32, i32) {
    %c0_i32 = arith.constant 0 : i32
    %c0_i32_0 = arith.constant 0 : i32
    %c0_i32_1 = arith.constant 0 : i32
    return %c0_i32, %c0_i32_0 : i32, i32
  }
  func.func @transform_5(%arg0: i32) -> (i32, i32) {
    %c0_i32 = arith.constant 0 : i32
    %c0_i32_0 = arith.constant 0 : i32
    %c0_i32_1 = arith.constant 0 : i32
    return %c0_i32, %c0_i32_0 : i32, i32
  }
  func.func @transform_6(%arg0: i32) -> (i32, i32) {
    %c0_i32 = arith.constant 0 : i32
    %c0_i32_0 = arith.constant 0 : i32
    %c0_i32_1 = arith.constant 0 : i32
    return %c0_i32, %c0_i32_0 : i32, i32
  }
  func.func @transform_7(%arg0: i32) -> (i32, i32) {
    %c0_i32 = arith.constant 0 : i32
    %c0_i32_0 = arith.constant 0 : i32
    %c0_i32_1 = arith.constant 0 : i32
    return %c0_i32, %c0_i32_0 : i32, i32
  }
  func.func @transform_8(%arg0: i32) -> (i32, i32) {
    %c0_i32 = arith.constant 0 : i32
    %c0_i32_0 = arith.constant 0 : i32
    return %arg0, %c0_i32 : i32, i32
  }
}

</mosaic_0001>

<llo_original>
// kernel: tpu_custom_call.1
$region0: #{tpu_custom_call.1}
  #allocation0 [shape = 'u32[]', space=smem, size = 0x4, offset = 0x4, fixed_abs, tag = 'smem constant byte address 0x4 - core index']
  #allocation1 [shape = 'u32[144,128]{1,0:T(1,128)}', space=vmem, size = 0x12000, scoped, tag = 'internal scratch']
  %s0 = inlined_call_operand.vmem [shape: s32[64,8], index: 0, kind: input, shape index: {}]
  %s1 = inlined_call_operand.vmem [shape: f32[64,1], index: 1, kind: input, shape index: {}]
  %s2 = inlined_call_operand.vmem [shape: bf16[128,32], index: 2, kind: input, shape index: {}]
  %s3 = inlined_call_operand.vmem [shape: f32[1,32], index: 3, kind: input, shape index: {}]
  %s4 = inlined_call_operand.vmem [shape: bf16[32,32], index: 4, kind: input, shape index: {}]
  %s5 = inlined_call_operand.vmem [shape: f32[1,32], index: 5, kind: input, shape index: {}]
  %s6 = inlined_call_operand.vmem [shape: bf16[32,128], index: 6, kind: input, shape index: {}]
  %s7 = inlined_call_operand.vmem [shape: f32[1,128], index: 7, kind: input, shape index: {}]
  %s8 = inlined_call_operand.hbm [shape: f32[64,128], index: 8, kind: output, shape index: {}]
  %s9 = sld [smem:[#allocation0]]
  $region65: #{tpu_custom_call.1} parent=0
    _
  %s11 = ssub.s32 1, %s9
  %s12 = scalar_select 0, %s11, %s9
  $region1: #{tpu_custom_call.1} parent=0
    #allocation2 [shape = 'u8[32768]{0}', space=vmem, size = 0x8000, scoped, tag = 'output window, operand 0']
    #allocation3 [shape = 's32[2]{0}', space=sflag, size = 0x8, scoped, tag = 'scoped memory for tpu_custom_call.1']
    %13 = vsyncpa [#allocation3], 0
    %s14 = scalar_lea.sflag [#allocation3], 1
    %15 = vsyncpa %s14, 0
    loop: start=0, step=1, limit=4
    $region2: #{tpu_custom_call.1} parent=1 // loop_pre_header
      _
    $region3: #{tpu_custom_call.1} parent=1 // loop_header
      %s17 = sphi 0, %s21
      %p18 = scmp.ge.s32.totalorder %s17, 4
      %s27 = sphi 0, %s29
      %s30 = sphi 0, %s27
      %s31 = sphi 0, %s30
      %s47 = sphi 0, %s31
      %s53 = sphi 0, %s55
      %s56 = sphi 0, %s53
      %s57 = sphi 0, %s56
      %s73 = sphi 0, %s57
      %s77 = sphi 0, %s77
      %s79 = sphi 0, %s77
      %s80 = sphi 0, %s79
      %s94 = sphi 0, %s80
      %s98 = sphi 0, %s98
      %s100 = sphi 0, %s98
      %s101 = sphi 0, %s100
      %s115 = sphi 0, %s101
      %s119 = sphi 0, %s119
      %s121 = sphi 0, %s119
      %s122 = sphi 0, %s121
      %s136 = sphi 0, %s122
      %s140 = sphi 0, %s140
      %s142 = sphi 0, %s140
      %s143 = sphi 0, %s142
      %s157 = sphi 0, %s143
      %s161 = sphi 0, %s161
      %s163 = sphi 0, %s161
      %s164 = sphi 0, %s163
      %s178 = sphi 0, %s164
      %s182 = sphi 0, %s182
      %s184 = sphi 0, %s182
      %s185 = sphi 0, %s184
      %s199 = sphi 0, %s185
      %s205 = sphi 0, %s207
      %s208 = sphi 0, %s205
      %s209 = sphi 0, %s208
      %s225 = sphi 0, %s209
    $region4: #{tpu_custom_call.1} parent=1 // loop_header_branch
      %20 = sbr.rel (%p18) target = $region8
    $region5: #{tpu_custom_call.1} parent=1 // loop_body
      %s22 = ssub.s32 %s17, 1
      %s23 = ssub.s32 %s17, 2
      %s24 = sadd.s32 %s17, 1
      %s25 = ssub.s32 %s17, %s24
      %p26 = scmp.eq.s32.totalorder %s25, 0
      %s28 = sadd.s32 %s27, 1
      %s29 = scalar_select %p26, %s27, %s28
      %p32 = pneg %p26
      %p33 = scmp.eq.s32.totalorder %s17, 1
      %p34 = por %p32, %p33
      %p35 = scmp.ne.s32.totalorder %s27, %s30
      %p36 = scmp.eq.s32.totalorder %s17, 0
      %p37 = por %p35, %p36
      %p38 = scmp.ne.s32.totalorder %s27, %s30
      %p39 = scmp.eq.s32.totalorder %s22, 1
      %p40 = por %p38, %p39
      %p41 = scmp.ne.s32.totalorder %s30, %s31
      %p42 = scmp.eq.s32.totalorder %s22, 0
      %p43 = por %p41, %p42
      %p44 = scmp.ne.s32.totalorder %s30, %s31
      %p45 = scmp.eq.s32.totalorder %s23, 1
      %p46 = por %p44, %p45
      %p48 = scmp.ne.s32.totalorder %s31, %s47
      %p49 = scmp.eq.s32.totalorder %s23, 0
      %p50 = por %p48, %p49
      %s51 = ssub.s32 %s17, %s24
      %p52 = scmp.eq.s32.totalorder %s51, 0
      %s54 = sadd.s32 %s53, 1
      %s55 = scalar_select %p52, %s53, %s54
      %p58 = pneg %p52
      %p59 = scmp.eq.s32.totalorder %s17, 1
      %p60 = por %p58, %p59
      %p61 = scmp.ne.s32.totalorder %s53, %s56
      %p62 = scmp.eq.s32.totalorder %s17, 0
      %p63 = por %p61, %p62
      %p64 = scmp.ne.s32.totalorder %s53, %s56
      %p65 = scmp.eq.s32.totalorder %s22, 1
      %p66 = por %p64, %p65
      %p67 = scmp.ne.s32.totalorder %s56, %s57
      %p68 = scmp.eq.s32.totalorder %s22, 0
      %p69 = por %p67, %p68
      %p70 = scmp.ne.s32.totalorder %s56, %s57
      %p71 = scmp.eq.s32.totalorder %s23, 1
      %p72 = por %p70, %p71
      %p74 = scmp.ne.s32.totalorder %s57, %s73
      %p75 = scmp.eq.s32.totalorder %s23, 0
      %p76 = por %p74, %p75
      %s78 = sadd.s32 %s77, 1
      %p81 = scmp.eq.s32.totalorder %s17, 1
      %p82 = scmp.ne.s32.totalorder %s77, %s79
      %p83 = scmp.eq.s32.totalorder %s17, 0
      %p84 = por %p82, %p83
      %p85 = scmp.ne.s32.totalorder %s77, %s79
      %p86 = scmp.eq.s32.totalorder %s22, 1
      %p87 = por %p85, %p86
      %p88 = scmp.ne.s32.totalorder %s79, %s80
      %p89 = scmp.eq.s32.totalorder %s22, 0
      %p90 = por %p88, %p89
      %p91 = scmp.ne.s32.totalorder %s79, %s80
      %p92 = scmp.eq.s32.totalorder %s23, 1
      %p93 = por %p91, %p92
      %p95 = scmp.ne.s32.totalorder %s80, %s94
      %p96 = scmp.eq.s32.totalorder %s23, 0
      %p97 = por %p95, %p96
      %s99 = sadd.s32 %s98, 1
      %p102 = scmp.eq.s32.totalorder %s17, 1
      %p103 = scmp.ne.s32.totalorder %s98, %s100
      %p104 = scmp.eq.s32.totalorder %s17, 0
      %p105 = por %p103, %p104
      %p106 = scmp.ne.s32.totalorder %s98, %s100
      %p107 = scmp.eq.s32.totalorder %s22, 1
      %p108 = por %p106, %p107
      %p109 = scmp.ne.s32.totalorder %s100, %s101
      %p110 = scmp.eq.s32.totalorder %s22, 0
      %p111 = por %p109, %p110
      %p112 = scmp.ne.s32.totalorder %s100, %s101
      %p113 = scmp.eq.s32.totalorder %s23, 1
      %p114 = por %p112, %p113
      %p116 = scmp.ne.s32.totalorder %s101, %s115
      %p117 = scmp.eq.s32.totalorder %s23, 0
      %p118 = por %p116, %p117
      %s120 = sadd.s32 %s119, 1
      %p123 = scmp.eq.s32.totalorder %s17, 1
      %p124 = scmp.ne.s32.totalorder %s119, %s121
      %p125 = scmp.eq.s32.totalorder %s17, 0
      %p126 = por %p124, %p125
      %p127 = scmp.ne.s32.totalorder %s119, %s121
      %p128 = scmp.eq.s32.totalorder %s22, 1
      %p129 = por %p127, %p128
      %p130 = scmp.ne.s32.totalorder %s121, %s122
      %p131 = scmp.eq.s32.totalorder %s22, 0
      %p132 = por %p130, %p131
      %p133 = scmp.ne.s32.totalorder %s121, %s122
      %p134 = scmp.eq.s32.totalorder %s23, 1
      %p135 = por %p133, %p134
      %p137 = scmp.ne.s32.totalorder %s122, %s136
      %p138 = scmp.eq.s32.totalorder %s23, 0
      %p139 = por %p137, %p138
      %s141 = sadd.s32 %s140, 1
      %p144 = scmp.eq.s32.totalorder %s17, 1
      %p145 = scmp.ne.s32.totalorder %s140, %s142
      %p146 = scmp.eq.s32.totalorder %s17, 0
      %p147 = por %p145, %p146
      %p148 = scmp.ne.s32.totalorder %s140, %s142
      %p149 = scmp.eq.s32.totalorder %s22, 1
      %p150 = por %p148, %p149
      %p151 = scmp.ne.s32.totalorder %s142, %s143
      %p152 = scmp.eq.s32.totalorder %s22, 0
      %p153 = por %p151, %p152
      %p154 = scmp.ne.s32.totalorder %s142, %s143
      %p155 = scmp.eq.s32.totalorder %s23, 1
      %p156 = por %p154, %p155
      %p158 = scmp.ne.s32.totalorder %s143, %s157
      %p159 = scmp.eq.s32.totalorder %s23, 0
      %p160 = por %p158, %p159
      %s162 = sadd.s32 %s161, 1
      %p165 = scmp.eq.s32.totalorder %s17, 1
      %p166 = scmp.ne.s32.totalorder %s161, %s163
      %p167 = scmp.eq.s32.totalorder %s17, 0
      %p168 = por %p166, %p167
      %p169 = scmp.ne.s32.totalorder %s161, %s163
      %p170 = scmp.eq.s32.totalorder %s22, 1
      %p171 = por %p169, %p170
      %p172 = scmp.ne.s32.totalorder %s163, %s164
      %p173 = scmp.eq.s32.totalorder %s22, 0
      %p174 = por %p172, %p173
      %p175 = scmp.ne.s32.totalorder %s163, %s164
      %p176 = scmp.eq.s32.totalorder %s23, 1
      %p177 = por %p175, %p176
      %p179 = scmp.ne.s32.totalorder %s164, %s178
      %p180 = scmp.eq.s32.totalorder %s23, 0
      %p181 = por %p179, %p180
      %s183 = sadd.s32 %s182, 1
      %p186 = scmp.eq.s32.totalorder %s17, 1
      %p187 = scmp.ne.s32.totalorder %s182, %s184
      %p188 = scmp.eq.s32.totalorder %s17, 0
      %p189 = por %p187, %p188
      %p190 = scmp.ne.s32.totalorder %s182, %s184
      %p191 = scmp.eq.s32.totalorder %s22, 1
      %p192 = por %p190, %p191
      %p193 = scmp.ne.s32.totalorder %s184, %s185
      %p194 = scmp.eq.s32.totalorder %s22, 0
      %p195 = por %p193, %p194
      %p196 = scmp.ne.s32.totalorder %s184, %s185
      %p197 = scmp.eq.s32.totalorder %s23, 1
      %p198 = por %p196, %p197
      %p200 = scmp.ne.s32.totalorder %s185, %s199
      %p201 = scmp.eq.s32.totalorder %s23, 0
      %p202 = por %p200, %p201
      %s203 = ssub.s32 %s17, %s24
      %p204 = scmp.eq.s32.totalorder %s203, 0
      %s206 = sadd.s32 %s205, 1
      %s207 = scalar_select %p204, %s205, %s206
      %p210 = pneg %p204
      %p211 = scmp.eq.s32.totalorder %s17, 1
      %p212 = por %p210, %p211
      %p213 = scmp.ne.s32.totalorder %s205, %s208
      %p214 = scmp.eq.s32.totalorder %s17, 0
      %p215 = por %p213, %p214
      %p216 = scmp.ne.s32.totalorder %s205, %s208
      %p217 = scmp.eq.s32.totalorder %s22, 1
      %p218 = por %p216, %p217
      %p219 = scmp.ne.s32.totalorder %s208, %s209
      %p220 = scmp.eq.s32.totalorder %s22, 0
      %p221 = por %p219, %p220
      %p222 = scmp.ne.s32.totalorder %s208, %s209
      %p223 = scmp.eq.s32.totalorder %s23, 1
      %p224 = por %p222, %p223
      %p226 = scmp.ne.s32.totalorder %s209, %s225
      %p227 = scmp.eq.s32.totalorder %s23, 0
      %p228 = por %p226, %p227
      %p229 = scmp.le.s32.totalorder 1, %s17
      %p230 = scmp.lt.s32.totalorder %s17, 3
      %p231 = pnand %p229, %p230
      %p232 = pneg %p231
      // Predicated region
      $region9: #{tpu_custom_call.1} parent=5 // pred_check
        _
      $region10: #{tpu_custom_call.1} parent=5 // pred_check_branch
        %234 = sbr.rel (%p231) target = $region12
      $region11: #{tpu_custom_call.1} parent=5 // pred_region
        %s235 = ssub.s32 %s17, 1
        // Predicated region
        $region13: #{tpu_custom_call.1} parent=11 // pred_check
          %p236 = pneg %p90
        $region14: #{tpu_custom_call.1} parent=11 // pred_check_branch
          %238 = sbr.rel (%p236) target = $region16
        $region15: #{tpu_custom_call.1} parent=11 // pred_region
          _
        $region16: #{tpu_custom_call.1} parent=11 // pred_fallthru
          _
        // Predicated region
        $region17: #{tpu_custom_call.1} parent=11 // pred_check
          %p239 = pneg %p111
        $region18: #{tpu_custom_call.1} parent=11 // pred_check_branch
          %241 = sbr.rel (%p239) target = $region20
        $region19: #{tpu_custom_call.1} parent=11 // pred_region
          _
        $region20: #{tpu_custom_call.1} parent=11 // pred_fallthru
          _
        // Predicated region
        $region21: #{tpu_custom_call.1} parent=11 // pred_check
          %p242 = pneg %p132
        $region22: #{tpu_custom_call.1} parent=11 // pred_check_branch
          %244 = sbr.rel (%p242) target = $region24
        $region23: #{tpu_custom_call.1} parent=11 // pred_region
          _
        $region24: #{tpu_custom_call.1} parent=11 // pred_fallthru
          _
        // Predicated region
        $region25: #{tpu_custom_call.1} parent=11 // pred_check
          %p245 = pneg %p153
        $region26: #{tpu_custom_call.1} parent=11 // pred_check_branch
          %247 = sbr.rel (%p245) target = $region28
        $region27: #{tpu_custom_call.1} parent=11 // pred_region
          _
        $region28: #{tpu_custom_call.1} parent=11 // pred_fallthru
          _
        // Predicated region
        $region29: #{tpu_custom_call.1} parent=11 // pred_check
          %p248 = pneg %p174
        $region30: #{tpu_custom_call.1} parent=11 // pred_check_branch
          %250 = sbr.rel (%p248) target = $region32
        $region31: #{tpu_custom_call.1} parent=11 // pred_region
          _
        $region32: #{tpu_custom_call.1} parent=11 // pred_fallthru
          _
        // Predicated region
        $region33: #{tpu_custom_call.1} parent=11 // pred_check
          %p251 = pneg %p195
        $region34: #{tpu_custom_call.1} parent=11 // pred_check_branch
          %253 = sbr.rel (%p251) target = $region36
        $region35: #{tpu_custom_call.1} parent=11 // pred_region
          _
        $region36: #{tpu_custom_call.1} parent=11 // pred_fallthru
          _
      $region12: #{tpu_custom_call.1} parent=5 // pred_fallthru
        _
      %p254 = scmp.lt.s32.totalorder %s17, 2
      // Predicated region
      $region37: #{tpu_custom_call.1} parent=5 // pred_check
        %p255 = pneg %p254
      $region38: #{tpu_custom_call.1} parent=5 // pred_check_branch
        %257 = sbr.rel (%p255) target = $region40
      $region39: #{tpu_custom_call.1} parent=5 // pred_region
        // Predicated region
        $region41: #{tpu_custom_call.1} parent=39 // pred_check
          %p258 = pneg %p37
        $region42: #{tpu_custom_call.1} parent=39 // pred_check_branch
          %260 = sbr.rel (%p258) target = $region44
        $region43: #{tpu_custom_call.1} parent=39 // pred_region
          %s261 = smul.u32 4, %s17
          %p262 = scmp.lt.s32.totalorder %s261, 7
          %s263 = scalar_select %p262, %s261, 7
          %s264 = smul.addr %s263, 8
          %s265 = scalar_lea.vmem %s0, %s264
          %s266 = smul.u32 4, %s17
        $region44: #{tpu_custom_call.1} parent=39 // pred_fallthru
          _
        // Predicated region
        $region45: #{tpu_custom_call.1} parent=39 // pred_check
          %p267 = pneg %p63
        $region46: #{tpu_custom_call.1} parent=39 // pred_check_branch
          %269 = sbr.rel (%p267) target = $region48
        $region47: #{tpu_custom_call.1} parent=39 // pred_region
          %s270 = smul.u32 4, %s17
          %p271 = scmp.lt.s32.totalorder %s270, 7
          %s272 = scalar_select %p271, %s270, 7
          %s273 = smul.addr %s272, 8
          %s274 = scalar_lea.vmem %s1, %s273
          %s275 = smul.u32 4, %s17
        $region48: #{tpu_custom_call.1} parent=39 // pred_fallthru
          _
      $region40: #{tpu_custom_call.1} parent=5 // pred_fallthru
        _
      %p276 = scmp.le.s32.totalorder 1, %s17
      %p277 = scmp.lt.s32.totalorder %s17, 3
      %p278 = pnand %p276, %p277
      %p279 = pneg %p278
      // Predicated region
      $region49: #{tpu_custom_call.1} parent=5 // pred_check
        _
      $region50: #{tpu_custom_call.1} parent=5 // pred_check_branch
        %281 = sbr.rel (%p278) target = $region52
      $region51: #{tpu_custom_call.1} parent=5 // pred_region
        %s282 = ssub.s32 %s17, 1
        %s283 = smul.u32 4, %s22
        %p284 = scmp.lt.s32.totalorder %s283, 7
        %s285 = scalar_select %p284, %s283, 7
        %s286 = smul.addr %s285, 8
        %s287 = scalar_lea.vmem %s0, %s286
        %p288 = pneg %p43
        %p289 = pneg %p40
        %s290 = smul.u32 4, %s22
        %p291 = scmp.lt.s32.totalorder %s290, 7
        %s292 = scalar_select %p291, %s290, 7
        %s293 = smul.addr %s292, 8
        %s294 = scalar_lea.vmem %s1, %s293
        %p295 = pneg %p69
        %p296 = pneg %p66
        %p297 = pneg %p90
        %p298 = pneg %p87
        %p299 = pneg %p111
        %p300 = pneg %p108
        %p301 = pneg %p132
        %p302 = pneg %p129
        %p303 = pneg %p153
        %p304 = pneg %p150
        %p305 = pneg %p174
        %p306 = pneg %p171
        %p307 = pneg %p195
        %p308 = pneg %p192
        %p309 = pneg %p221
        %p310 = pneg %p218
        %s311 = sand.u32 %s208, 1
        %s312 = scalar_lea.sflag [#allocation3], %s311
        %s313 = sand.u32 %s208, 1
        %s314 = smul.addr %s313, 32
        %s315 = scalar_lea.vmem [#allocation2], %s314
        %s316 = smul.u32 4, %s22
        %p317 = scmp.lt.s32.totalorder %s316, 7
        %s318 = scalar_select %p317, %s316, 7
        %s319 = smul.addr %s318, 8
        %s320 = scalar_lea.vmem %s0, %s319
        %s321 = smul.u32 4, %s22
        %s322 = smul.u32 4, %s22
        %p323 = scmp.lt.s32.totalorder %s322, 7
        %s324 = scalar_select %p323, %s322, 7
        %s325 = smul.addr %s324, 8
        %s326 = scalar_lea.vmem %s1, %s325
        %s327 = smul.u32 4, %s22
        %s328 = smul.u32 4, %s22
        %v330 = vld [vmem:[%s320] sm:$0xff]
        %v331 = vld [vmem:[%s320 + $0x8] sm:$0xff]
        %v332 = vld [vmem:[%s320 + $0x10] sm:$0xff]
        %v333 = vld [vmem:[%s320 + $0x18] sm:$0xff]
        %v334 = vlaneseq
        %v335 = vand.u32 %v334, 127
        %336 = vset.pattern.permute.xlu0 0
        %337 = vperm.xlu0 %336, %v330
        %v338 = vpop.permute.xlu0 %337
        %339 = vset.pattern.permute.xlu0 0
        %340 = vperm.xlu0 %339, %v331
        %v341 = vpop.permute.xlu0 %340
        %342 = vset.pattern.permute.xlu0 0
        %343 = vperm.xlu0 %342, %v332
        %v344 = vpop.permute.xlu0 %343
        %345 = vset.pattern.permute.xlu0 0
        %346 = vperm.xlu0 %345, %v333
        %v347 = vpop.permute.xlu0 %346
        %vm348 = vcmp.eq.s32.totalorder %v335, %v338
        %vm349 = vcmp.eq.s32.totalorder %v335, %v341
        %vm350 = vcmp.eq.s32.totalorder %v335, %v344
        %vm351 = vcmp.eq.s32.totalorder %v335, %v347
        %v352 = vsel %vm348, 1.0, 0.0
        %v353 = vsel %vm349, 1.0, 0.0
        %v354 = vsel %vm350, 1.0, 0.0
        %v355 = vsel %vm351, 1.0, 0.0
        %v356 = vadd.s32 %v330, 4
        %v357 = vadd.s32 %v331, 4
        %v358 = vadd.s32 %v332, 4
        %v359 = vadd.s32 %v333, 4
        %360 = vset.pattern.permute.xlu0 1
        %361 = vperm.xlu0 %360, %v356
        %v362 = vpop.permute.xlu0 %361
        %363 = vset.pattern.permute.xlu0 1
        %364 = vperm.xlu0 %363, %v357
        %v365 = vpop.permute.xlu0 %364
        %366 = vset.pattern.permute.xlu0 1
        %367 = vperm.xlu0 %366, %v358
        %v368 = vpop.permute.xlu0 %367
        %369 = vset.pattern.permute.xlu0 1
        %370 = vperm.xlu0 %369, %v359
        %v371 = vpop.permute.xlu0 %370
        %vm372 = vcmp.eq.s32.totalorder %v335, %v362
        %vm373 = vcmp.eq.s32.totalorder %v335, %v365
        %vm374 = vcmp.eq.s32.totalorder %v335, %v368
        %vm375 = vcmp.eq.s32.totalorder %v335, %v371
        %v376 = vsel %vm372, 1.0, %v352
        %v377 = vsel %vm373, 1.0, %v353
        %v378 = vsel %vm374, 1.0, %v354
        %v379 = vsel %vm375, 1.0, %v355
        %v380 = vadd.s32 %v330, 8
        %v381 = vadd.s32 %v331, 8
        %v382 = vadd.s32 %v332, 8
        %v383 = vadd.s32 %v333, 8
        %384 = vset.pattern.permute.xlu0 2
        %385 = vperm.xlu0 %384, %v380
        %v386 = vpop.permute.xlu0 %385
        %387 = vset.pattern.permute.xlu0 2
        %388 = vperm.xlu0 %387, %v381
        %v389 = vpop.permute.xlu0 %388
        %390 = vset.pattern.permute.xlu0 2
        %391 = vperm.xlu0 %390, %v382
        %v392 = vpop.permute.xlu0 %391
        %393 = vset.pattern.permute.xlu0 2
        %394 = vperm.xlu0 %393, %v383
        %v395 = vpop.permute.xlu0 %394
        %vm396 = vcmp.eq.s32.totalorder %v335, %v386
        %vm397 = vcmp.eq.s32.totalorder %v335, %v389
        %vm398 = vcmp.eq.s32.totalorder %v335, %v392
        %vm399 = vcmp.eq.s32.totalorder %v335, %v395
        %v400 = vsel %vm396, 1.0, %v376
        %v401 = vsel %vm397, 1.0, %v377
        %v402 = vsel %vm398, 1.0, %v378
        %v403 = vsel %vm399, 1.0, %v379
        %v404 = vadd.s32 %v330, 12
        %v405 = vadd.s32 %v331, 12
        %v406 = vadd.s32 %v332, 12
        %v407 = vadd.s32 %v333, 12
        %408 = vset.pattern.permute.xlu0 3
        %409 = vperm.xlu0 %408, %v404
        %v410 = vpop.permute.xlu0 %409
        %411 = vset.pattern.permute.xlu0 3
        %412 = vperm.xlu0 %411, %v405
        %v413 = vpop.permute.xlu0 %412
        %414 = vset.pattern.permute.xlu0 3
        %415 = vperm.xlu0 %414, %v406
        %v416 = vpop.permute.xlu0 %415
        %417 = vset.pattern.permute.xlu0 3
        %418 = vperm.xlu0 %417, %v407
        %v419 = vpop.permute.xlu0 %418
        %vm420 = vcmp.eq.s32.totalorder %v335, %v410
        %vm421 = vcmp.eq.s32.totalorder %v335, %v413
        %vm422 = vcmp.eq.s32.totalorder %v335, %v416
        %vm423 = vcmp.eq.s32.totalorder %v335, %v419
        %v424 = vsel %vm420, 1.0, %v400
        %v425 = vsel %vm421, 1.0, %v401
        %v426 = vsel %vm422, 1.0, %v402
        %v427 = vsel %vm423, 1.0, %v403
        %v428 = vadd.s32 %v330, 16
        %v429 = vadd.s32 %v331, 16
        %v430 = vadd.s32 %v332, 16
        %v431 = vadd.s32 %v333, 16
        %432 = vset.pattern.permute.xlu0 4
        %433 = vperm.xlu0 %432, %v428
        %v434 = vpop.permute.xlu0 %433
        %435 = vset.pattern.permute.xlu0 4
        %436 = vperm.xlu0 %435, %v429
        %v437 = vpop.permute.xlu0 %436
        %438 = vset.pattern.permute.xlu0 4
        %439 = vperm.xlu0 %438, %v430
        %v440 = vpop.permute.xlu0 %439
        %441 = vset.pattern.permute.xlu0 4
        %442 = vperm.xlu0 %441, %v431
        %v443 = vpop.permute.xlu0 %442
        %vm444 = vcmp.eq.s32.totalorder %v335, %v434
        %vm445 = vcmp.eq.s32.totalorder %v335, %v437
        %vm446 = vcmp.eq.s32.totalorder %v335, %v440
        %vm447 = vcmp.eq.s32.totalorder %v335, %v443
        %v448 = vsel %vm444, 1.0, %v424
        %v449 = vsel %vm445, 1.0, %v425
        %v450 = vsel %vm446, 1.0, %v426
        %v451 = vsel %vm447, 1.0, %v427
        %v452 = vadd.s32 %v330, 20
        %v453 = vadd.s32 %v331, 20
        %v454 = vadd.s32 %v332, 20
        %v455 = vadd.s32 %v333, 20
        %456 = vset.pattern.permute.xlu0 5
        %457 = vperm.xlu0 %456, %v452
        %v458 = vpop.permute.xlu0 %457
        %459 = vset.pattern.permute.xlu0 5
        %460 = vperm.xlu0 %459, %v453
        %v461 = vpop.permute.xlu0 %460
        %462 = vset.pattern.permute.xlu0 5
        %463 = vperm.xlu0 %462, %v454
        %v464 = vpop.permute.xlu0 %463
        %465 = vset.pattern.permute.xlu0 5
        %466 = vperm.xlu0 %465, %v455
        %v467 = vpop.permute.xlu0 %466
        %vm468 = vcmp.eq.s32.totalorder %v335, %v458
        %vm469 = vcmp.eq.s32.totalorder %v335, %v461
        %vm470 = vcmp.eq.s32.totalorder %v335, %v464
        %vm471 = vcmp.eq.s32.totalorder %v335, %v467
        %v472 = vsel %vm468, 1.0, %v448
        %v473 = vsel %vm469, 1.0, %v449
        %v474 = vsel %vm470, 1.0, %v450
        %v475 = vsel %vm471, 1.0, %v451
        %v476 = vadd.s32 %v330, 24
        %v477 = vadd.s32 %v331, 24
        %v478 = vadd.s32 %v332, 24
        %v479 = vadd.s32 %v333, 24
        %480 = vset.pattern.permute.xlu0 6
        %481 = vperm.xlu0 %480, %v476
        %v482 = vpop.permute.xlu0 %481
        %483 = vset.pattern.permute.xlu0 6
        %484 = vperm.xlu0 %483, %v477
        %v485 = vpop.permute.xlu0 %484
        %486 = vset.pattern.permute.xlu0 6
        %487 = vperm.xlu0 %486, %v478
        %v488 = vpop.permute.xlu0 %487
        %489 = vset.pattern.permute.xlu0 6
        %490 = vperm.xlu0 %489, %v479
        %v491 = vpop.permute.xlu0 %490
        %vm492 = vcmp.eq.s32.totalorder %v335, %v482
        %vm493 = vcmp.eq.s32.totalorder %v335, %v485
        %vm494 = vcmp.eq.s32.totalorder %v335, %v488
        %vm495 = vcmp.eq.s32.totalorder %v335, %v491
        %v496 = vsel %vm492, 1.0, %v472
        %v497 = vsel %vm493, 1.0, %v473
        %v498 = vsel %vm494, 1.0, %v474
        %v499 = vsel %vm495, 1.0, %v475
        %v500 = vadd.s32 %v330, 28
        %v501 = vadd.s32 %v331, 28
        %v502 = vadd.s32 %v332, 28
        %v503 = vadd.s32 %v333, 28
        %504 = vset.pattern.permute.xlu0 7
        %505 = vperm.xlu0 %504, %v500
        %v506 = vpop.permute.xlu0 %505
        %507 = vset.pattern.permute.xlu0 7
        %508 = vperm.xlu0 %507, %v501
        %v509 = vpop.permute.xlu0 %508
        %510 = vset.pattern.permute.xlu0 7
        %511 = vperm.xlu0 %510, %v502
        %v512 = vpop.permute.xlu0 %511
        %513 = vset.pattern.permute.xlu0 7
        %514 = vperm.xlu0 %513, %v503
        %v515 = vpop.permute.xlu0 %514
        %vm516 = vcmp.eq.s32.totalorder %v335, %v506
        %vm517 = vcmp.eq.s32.totalorder %v335, %v509
        %vm518 = vcmp.eq.s32.totalorder %v335, %v512
        %vm519 = vcmp.eq.s32.totalorder %v335, %v515
        %v520 = vsel %vm516, 1.0, %v496
        %v521 = vsel %vm517, 1.0, %v497
        %v522 = vsel %vm518, 1.0, %v498
        %v523 = vsel %vm519, 1.0, %v499
        %vm524 = vcmp.eq.s32.totalorder %v335, 32
        %v525 = vld [vmem:[%s326] sm:$0xff]
        %v526 = vld [vmem:[%s326 + $0x8] sm:$0xff]
        %v527 = vld [vmem:[%s326 + $0x10] sm:$0xff]
        %v528 = vld [vmem:[%s326 + $0x18] sm:$0xff]
        %530 = vset.pattern.permute.xlu0 0
        %531 = vperm.xlu0 %530, %v525
        %v532 = vpop.permute.xlu0 %531
        %535 = vset.pattern.permute.xlu0 0
        %536 = vperm.xlu0 %535, %v526
        %v537 = vpop.permute.xlu0 %536
        %540 = vset.pattern.permute.xlu0 0
        %541 = vperm.xlu0 %540, %v527
        %v542 = vpop.permute.xlu0 %541
        %545 = vset.pattern.permute.xlu0 0
        %546 = vperm.xlu0 %545, %v528
        %v547 = vpop.permute.xlu0 %546
        %v549 = vsel %vm524, %v532, %v520
        %v550 = vsel %vm524, %v537, %v521
        %v551 = vsel %vm524, %v542, %v522
        %v552 = vsel %vm524, %v547, %v523
        %v553 = vpack.c.bf16 %v550, %v549
        %v554 = vpack.c.bf16 %v552, %v551
        %v555 = vld [vmem:[%s2] sm:$0xf]
        %v556 = vld [vmem:[%s2 + $0x4] sm:$0xf]
        %v557 = vld [vmem:[%s2 + $0x8] sm:$0xf]
        %v558 = vld [vmem:[%s2 + $0xc] sm:$0xf]
        %v559 = vld [vmem:[%s2 + $0x10] sm:$0xf]
        %v560 = vld [vmem:[%s2 + $0x14] sm:$0xf]
        %v561 = vld [vmem:[%s2 + $0x18] sm:$0xf]
        %v562 = vld [vmem:[%s2 + $0x1c] sm:$0xf]
        %v563 = vld [vmem:[%s2 + $0x20] sm:$0xf]
        %v564 = vld [vmem:[%s2 + $0x24] sm:$0xf]
        %v565 = vld [vmem:[%s2 + $0x28] sm:$0xf]
        %v566 = vld [vmem:[%s2 + $0x2c] sm:$0xf]
        %v567 = vld [vmem:[%s2 + $0x30] sm:$0xf]
        %v568 = vld [vmem:[%s2 + $0x34] sm:$0xf]
        %v569 = vld [vmem:[%s2 + $0x38] sm:$0xf]
        %v570 = vld [vmem:[%s2 + $0x3c] sm:$0xf]
        %v571 = vld [vmem:[%s3] sm:$0x1]
        %v573 = vlaneseq
        %v574 = vshrl.u32 %v573, 7
        %v575 = vsub.s32 0, %v574
        %v576 = vrot.slane %v571, %v575
        %v594 = vunpack.c.l.b16 %v555
        %v595 = vunpack.c.l.b16 %v556
        %v596 = vunpack.c.l.b16 %v557
        %v597 = vunpack.c.l.b16 %v558
        %v598 = vunpack.c.l.b16 %v559
        %v599 = vunpack.c.l.b16 %v560
        %v600 = vunpack.c.l.b16 %v561
        %v601 = vunpack.c.l.b16 %v562
        %v602 = vunpack.c.l.b16 %v563
        %v603 = vunpack.c.l.b16 %v564
        %v604 = vunpack.c.l.b16 %v565
        %v605 = vunpack.c.l.b16 %v566
        %v606 = vunpack.c.l.b16 %v567
        %v607 = vunpack.c.l.b16 %v568
        %v608 = vunpack.c.l.b16 %v569
        %v609 = vunpack.c.l.b16 %v570
        %v610 = vpack.c.b16 %v595, %v594
        %v611 = vpack.c.b16 %v597, %v596
        %v612 = vpack.c.b16 %v599, %v598
        %v613 = vpack.c.b16 %v601, %v600
        %v614 = vpack.c.b16 %v603, %v602
        %v615 = vpack.c.b16 %v605, %v604
        %v616 = vpack.c.b16 %v607, %v606
        %v617 = vpack.c.b16 %v609, %v608
        %626 = vmatprep.subr.bf16.mxu0 0
        %627 = vmatpush1.bf16.msra.mxu0 %v610
        %628 = vmatprep.subr.bf16.mxu0 0
        %629 = vmatpush1.bf16.msra.mxu0 %v611
        %630 = vmatprep.subr.bf16.mxu0 0
        %631 = vmatpush1.bf16.msra.mxu0 %v612
        %632 = vmatprep.subr.bf16.mxu0 0
        %633 = vmatpush1.bf16.msra.mxu0 %v613
        %634 = vmatprep.subr.bf16.mxu0 0
        %635 = vmatpush1.bf16.msra.mxu0 %v614
        %636 = vmatprep.subr.bf16.mxu0 0
        %637 = vmatpush1.bf16.msra.mxu0 %v615
        %638 = vmatprep.subr.bf16.mxu0 0
        %639 = vmatpush1.bf16.msra.mxu0 %v616
        %640 = vmatprep.subr.bf16.mxu0 0
        %641 = vmatpush1.bf16.msra.mxu0 %v617
        %642 = vmatprep.subr.bf16.mxu0 0
        %643 = vmatpush1.bf16.msra.mxu0 0
        %644 = vmatprep.subr.bf16.mxu0 0
        %645 = vmatpush1.bf16.msra.mxu0 0
        %646 = vmatprep.subr.bf16.mxu0 0
        %647 = vmatpush1.bf16.msra.mxu0 0
        %648 = vmatprep.subr.bf16.mxu0 0
        %649 = vmatpush1.bf16.msra.mxu0 0
        %650 = vmatprep.subr.bf16.mxu0 0
        %651 = vmatpush1.bf16.msra.mxu0 0
        %652 = vmatprep.subr.bf16.mxu0 0
        %653 = vmatpush1.bf16.msra.mxu0 0
        %654 = vmatprep.subr.bf16.mxu0 0
        %655 = vmatpush1.bf16.msra.mxu0 0
        %656 = vmatprep.subr.bf16.mxu0 0
        %657 = vmatpush1.bf16.msra.mxu0 0
        %658 = vmatprep.mubr.bf16.mxu0 0
        %659 = vmatmul.mubr.bf16.gmra.mrb[0].mxu0 %v553
        %v660 = vpop.f32.mrb[0].mxu0
        %v661 = vadd.f32 %v576, %v660
        %v662 = vpop.f32.mrb[0].mxu0
        %v663 = vpop.f32.mrb[0].mxu0
        %v664 = vadd.f32 %v576, %v663
        %v665 = vpop.f32.mrb[0].mxu0
        %666 = vmatprep.mubr.bf16.mxu0 0
        %667 = vmatmul.mubr.bf16.gmra.mrb[0].mxu0 %v554
        %v668 = vpop.f32.mrb[0].mxu0
        %v669 = vadd.f32 %v576, %v668
        %v670 = vpop.f32.mrb[0].mxu0
        %v671 = vpop.f32.mrb[0].mxu0
        %v672 = vadd.f32 %v576, %v671
        %v673 = vpop.f32.mrb[0].mxu0
        %674 = vdwg.mxu0
        %v675 = vmax.f32 %v661, 0.0
        %v676 = vmax.f32 %v664, 0.0
        %v677 = vmax.f32 %v669, 0.0
        %v678 = vmax.f32 %v672, 0.0
        %v679 = vpack.c.bf16 %v676, %v675
        %v680 = vpack.c.bf16 %v678, %v677
        %v681 = vld [vmem:[%s4] sm:$0xf]
        %v682 = vld [vmem:[%s4 + $0x4] sm:$0xf]
        %v683 = vld [vmem:[%s4 + $0x8] sm:$0xf]
        %v684 = vld [vmem:[%s4 + $0xc] sm:$0xf]
        %v685 = vld [vmem:[%s5] sm:$0x1]
        %v687 = vlaneseq
        %v688 = vshrl.u32 %v687, 7
        %v689 = vsub.s32 0, %v688
        %v690 = vrot.slane %v685, %v689
        %v696 = vunpack.c.l.b16 %v681
        %v697 = vunpack.c.l.b16 %v682
        %v698 = vunpack.c.l.b16 %v683
        %v699 = vunpack.c.l.b16 %v684
        %v700 = vpack.c.b16 %v697, %v696
        %v701 = vpack.c.b16 %v699, %v698
        %vm704 = vcmask 261120
        %v706 = vsel %vm704, %v679, 0
        %v709 = vsel %vm704, %v680, 0
        %711 = vmatprep.subr.bf16.mxu0 0
        %712 = vmatpush1.bf16.msra.mxu0 %v700
        %713 = vmatprep.subr.bf16.mxu0 0
        %714 = vmatpush1.bf16.msra.mxu0 %v701
        %715 = vmatprep.subr.bf16.mxu0 0
        %716 = vmatpush1.bf16.msra.mxu0 0
        %717 = vmatprep.subr.bf16.mxu0 0
        %718 = vmatpush1.bf16.msra.mxu0 0
        %719 = vmatprep.subr.bf16.mxu0 0
        %720 = vmatpush1.bf16.msra.mxu0 0
        %721 = vmatprep.subr.bf16.mxu0 0
        %722 = vmatpush1.bf16.msra.mxu0 0
        %723 = vmatprep.subr.bf16.mxu0 0
        %724 = vmatpush1.bf16.msra.mxu0 0
        %725 = vmatprep.subr.bf16.mxu0 0
        %726 = vmatpush1.bf16.msra.mxu0 0
        %727 = vmatprep.subr.bf16.mxu0 0
        %728 = vmatpush1.bf16.msra.mxu0 0
        %729 = vmatprep.subr.bf16.mxu0 0
        %730 = vmatpush1.bf16.msra.mxu0 0
        %731 = vmatprep.subr.bf16.mxu0 0
        %732 = vmatpush1.bf16.msra.mxu0 0
        %733 = vmatprep.subr.bf16.mxu0 0
        %734 = vmatpush1.bf16.msra.mxu0 0
        %735 = vmatprep.subr.bf16.mxu0 0
        %736 = vmatpush1.bf16.msra.mxu0 0
        %737 = vmatprep.subr.bf16.mxu0 0
        %738 = vmatpush1.bf16.msra.mxu0 0
        %739 = vmatprep.subr.bf16.mxu0 0
        %740 = vmatpush1.bf16.msra.mxu0 0
        %741 = vmatprep.subr.bf16.mxu0 0
        %742 = vmatpush1.bf16.msra.mxu0 0
        %743 = vmatprep.mubr.bf16.mxu0 0
        %744 = vmatmul.mubr.bf16.gmra.mrb[0].mxu0 %v706
        %v745 = vpop.f32.mrb[0].mxu0
        %v746 = vadd.f32 %v690, %v745
        %v747 = vpop.f32.mrb[0].mxu0
        %v748 = vpop.f32.mrb[0].mxu0
        %v749 = vadd.f32 %v690, %v748
        %v750 = vpop.f32.mrb[0].mxu0
        %751 = vmatprep.mubr.bf16.mxu0 0
        %752 = vmatmul.mubr.bf16.gmra.mrb[0].mxu0 %v709
        %v753 = vpop.f32.mrb[0].mxu0
        %v754 = vadd.f32 %v690, %v753
        %v755 = vpop.f32.mrb[0].mxu0
        %v756 = vpop.f32.mrb[0].mxu0
        %v757 = vadd.f32 %v690, %v756
        %v758 = vpop.f32.mrb[0].mxu0
        %759 = vdwg.mxu0
        %v760 = vmax.f32 %v746, 0.0
        %v761 = vmax.f32 %v749, 0.0
        %v762 = vmax.f32 %v754, 0.0
        %v763 = vmax.f32 %v757, 0.0
        %v764 = vpack.c.bf16 %v761, %v760
        %v765 = vpack.c.bf16 %v763, %v762
        %v766 = vld [vmem:[%s6] sm:$0xf]
        %v767 = vld [vmem:[%s6 + $0x4] sm:$0xf]
        %v768 = vld [vmem:[%s6 + $0x8] sm:$0xf]
        %v769 = vld [vmem:[%s6 + $0xc] sm:$0xf]
        %v770 = vld [vmem:[%s7] sm:$0x1]
        %v772 = vlaneseq
        %v773 = vshrl.u32 %v772, 7
        %v774 = vsub.s32 0, %v773
        %v775 = vrot.slane %v770, %v774
        %v781 = vunpack.c.l.b16 %v766
        %v782 = vunpack.c.l.b16 %v767
        %v783 = vunpack.c.l.b16 %v768
        %v784 = vunpack.c.l.b16 %v769
        %v785 = vpack.c.b16 %v782, %v781
        %v786 = vpack.c.b16 %v784, %v783
        %v790 = vsel %vm704, %v764, 0
        %v793 = vsel %vm704, %v765, 0
        %795 = vmatprep.subr.bf16.mxu0 0
        %796 = vmatpush1.bf16.msra.mxu0 %v785
        %797 = vmatprep.subr.bf16.mxu0 0
        %798 = vmatpush1.bf16.msra.mxu0 %v786
        %799 = vmatprep.subr.bf16.mxu0 0
        %800 = vmatpush1.bf16.msra.mxu0 0
        %801 = vmatprep.subr.bf16.mxu0 0
        %802 = vmatpush1.bf16.msra.mxu0 0
        %803 = vmatprep.subr.bf16.mxu0 0
        %804 = vmatpush1.bf16.msra.mxu0 0
        %805 = vmatprep.subr.bf16.mxu0 0
        %806 = vmatpush1.bf16.msra.mxu0 0
        %807 = vmatprep.subr.bf16.mxu0 0
        %808 = vmatpush1.bf16.msra.mxu0 0
        %809 = vmatprep.subr.bf16.mxu0 0
        %810 = vmatpush1.bf16.msra.mxu0 0
        %811 = vmatprep.subr.bf16.mxu0 0
        %812 = vmatpush1.bf16.msra.mxu0 0
        %813 = vmatprep.subr.bf16.mxu0 0
        %814 = vmatpush1.bf16.msra.mxu0 0
        %815 = vmatprep.subr.bf16.mxu0 0
        %816 = vmatpush1.bf16.msra.mxu0 0
        %817 = vmatprep.subr.bf16.mxu0 0
        %818 = vmatpush1.bf16.msra.mxu0 0
        %819 = vmatprep.subr.bf16.mxu0 0
        %820 = vmatpush1.bf16.msra.mxu0 0
        %821 = vmatprep.subr.bf16.mxu0 0
        %822 = vmatpush1.bf16.msra.mxu0 0
        %823 = vmatprep.subr.bf16.mxu0 0
        %824 = vmatpush1.bf16.msra.mxu0 0
        %825 = vmatprep.subr.bf16.mxu0 0
        %826 = vmatpush1.bf16.msra.mxu0 0
        %827 = vmatprep.mubr.bf16.mxu0 0
        %828 = vmatmul.mubr.bf16.gmra.mrb[0].mxu0 %v790
        %v829 = vpop.f32.mrb[0].mxu0
        %v830 = vadd.f32 %v775, %v829
        %v831 = vpop.f32.mrb[0].mxu0
        %v832 = vpop.f32.mrb[0].mxu0
        %v833 = vadd.f32 %v775, %v832
        %v834 = vpop.f32.mrb[0].mxu0
        %835 = vmatprep.mubr.bf16.mxu0 0
        %836 = vmatmul.mubr.bf16.gmra.mrb[0].mxu0 %v793
        %v837 = vpop.f32.mrb[0].mxu0
        %v838 = vadd.f32 %v775, %v837
        %v839 = vpop.f32.mrb[0].mxu0
        %v840 = vpop.f32.mrb[0].mxu0
        %v841 = vadd.f32 %v775, %v840
        %v842 = vpop.f32.mrb[0].mxu0
        %843 = vdwg.mxu0
        %844 = vmax.xlane.f32.xlu0 %v830
        %v845 = vpop.xlane.xlu0 %844
        %846 = vmax.xlane.f32.xlu0 %v833
        %v847 = vpop.xlane.xlu0 %846
        %848 = vmax.xlane.f32.xlu0 %v838
        %v849 = vpop.xlane.xlu0 %848
        %850 = vmax.xlane.f32.xlu0 %v841
        %v851 = vpop.xlane.xlu0 %850
        %v852 = vsub.f32 %v830, %v845
        %v853 = vsub.f32 %v833, %v847
        %v854 = vsub.f32 %v838, %v849
        %v855 = vsub.f32 %v841, %v851
        %v856 = vmul.f32 %v852, 1.442695
        %v857 = vpow.pop %v856
        %v858 = vmul.f32 %v853, 1.442695
        %v859 = vpow.pop %v858
        %v860 = vmul.f32 %v854, 1.442695
        %v861 = vpow.pop %v860
        %v862 = vmul.f32 %v855, 1.442695
        %v863 = vpow.pop %v862
        %864 = vadd.xlane.f32.xlu0 %v857
        %v865 = vpop.xlane.xlu0 %864
        %866 = vadd.xlane.f32.xlu0 %v859
        %v867 = vpop.xlane.xlu0 %866
        %868 = vadd.xlane.f32.xlu0 %v861
        %v869 = vpop.xlane.xlu0 %868
        %870 = vadd.xlane.f32.xlu0 %v863
        %v871 = vpop.xlane.xlu0 %870
        %v872 = vrcp.pop %v865
        %v873 = vmul.f32 1.0, %v872
        %v874 = vrcp.pop %v867
        %v875 = vmul.f32 1.0, %v874
        %v876 = vrcp.pop %v869
        %v877 = vmul.f32 1.0, %v876
        %v878 = vrcp.pop %v871
        %v879 = vmul.f32 1.0, %v878
        %v880 = vmul.f32 %v857, %v873
        %v881 = vmul.f32 %v859, %v875
        %v882 = vmul.f32 %v861, %v877
        %v883 = vmul.f32 %v863, %v879
        %884 = vst [vmem:[%s315] sm:$0xff] %v880
        %885 = vst [vmem:[%s315 + $0x8] sm:$0xff] %v881
        %886 = vst [vmem:[%s315 + $0x10] sm:$0xff] %v882
        %887 = vst [vmem:[%s315 + $0x18] sm:$0xff] %v883
        %s888 = sand.u32 %s208, 1
        %s889 = scalar_lea.sflag [#allocation3], %s888
        %s890 = sand.u32 %s208, 1
        %s891 = smul.addr %s890, 32
        %s892 = scalar_lea.vmem [#allocation2], %s891
        // Predicated region
        $region53: #{tpu_custom_call.1} parent=51 // pred_check
          %p893 = pneg %p218
        $region54: #{tpu_custom_call.1} parent=51 // pred_check_branch
          %895 = sbr.rel (%p893) target = $region56
        $region55: #{tpu_custom_call.1} parent=51 // pred_region
          %s896 = smul.u32 4, %s22
          %s898 = ssub.s32 512, 512
          %899 = vsyncadd %s889, %s898
          %s900 = smul.addr %s896, 128
          %s901 = scalar_lea.hbm %s8, %s900
          %s902 = sshll.u32 %s892, 4
          %s903 = int_to_ptr.vmem [resolvable:$true] %s902
          %908 = dma.vmem_to_hbm [thread:$0]  %s903, 512, %s901, %s889, 128, 128, 8
        $region56: #{tpu_custom_call.1} parent=51 // pred_fallthru
          _
      $region52: #{tpu_custom_call.1} parent=5 // pred_fallthru
        _
      %p909 = scmp.le.s32.totalorder 2, %s17
      // Predicated region
      $region57: #{tpu_custom_call.1} parent=5 // pred_check
        %p910 = pneg %p909
      $region58: #{tpu_custom_call.1} parent=5 // pred_check_branch
        %912 = sbr.rel (%p910) target = $region60
      $region59: #{tpu_custom_call.1} parent=5 // pred_region
        %s913 = ssub.s32 %s17, 2
        // Predicated region
        $region61: #{tpu_custom_call.1} parent=59 // pred_check
          %p914 = pneg %p224
        $region62: #{tpu_custom_call.1} parent=59 // pred_check_branch
          %916 = sbr.rel (%p914) target = $region64
        $region63: #{tpu_custom_call.1} parent=59 // pred_region
          %s917 = sand.u32 %s209, 1
          %s918 = scalar_lea.sflag [#allocation3], %s917
          %s919 = sand.u32 %s209, 1
          %s920 = smul.addr %s919, 32
          %s921 = scalar_lea.vmem [#allocation2], %s920
          %922 = dma.done %s918, 512
        $region64: #{tpu_custom_call.1} parent=59 // pred_fallthru
          _
      $region60: #{tpu_custom_call.1} parent=5 // pred_fallthru
        _
    $region6: #{tpu_custom_call.1} parent=1 // loop_footer
      %s21 = sadd.s32 1, %s17
    $region7: #{tpu_custom_call.1} parent=1 // loop_footer_branch
      %16 = sbr.rel target = $region3
    $region8: #{tpu_custom_call.1} parent=1 // loop_exit
      _
    %923 = vsyncpa [#allocation3], 1
    %s924 = scalar_lea.sflag [#allocation3], 1
    %925 = vsyncpa %s924, 1

</llo_original>
